<compile_context>
chip_gen: v6e
topology: v6e:2x2x1
jax: 0.10.0
libtpu: 0.0.40
codegen_flags: <defaults>
</compile_context>

<pallas_src>
import functools

import jax
import jax.numpy as jnp
from jax import lax
from jax.experimental import pallas as pl
from jax.experimental.pallas import tpu as pltpu


# ---------------------------------------------------------------------------
# Kernels (grid = (n_tiles_N, n_tiles_K); k axis is usually size 1)
# ---------------------------------------------------------------------------
def _noisy_linear_train_kernel(x_ref, wmu_ref, wsig_ref, weps_ref,
                               bmu_ref, bsig_ref, beps_ref, o_ref):
    k = pl.program_id(1)

    @pl.when(k == 0)
    def _():
        o_ref[...] = jnp.zeros_like(o_ref)

    # Noisy weight tile (TN, TK); contract dim 1 of both operands -> (B, TN).
    w = wmu_ref[...] + wsig_ref[...] * weps_ref[...]
    o_ref[...] += lax.dot_general(
        x_ref[...], w,
        dimension_numbers=(((1,), (1,)), ((), ())),
        preferred_element_type=jnp.float32)

    @pl.when(k == pl.num_programs(1) - 1)
    def _():
        o_ref[...] += bmu_ref[...] + bsig_ref[...] * beps_ref[...]   # (1, TN)


def _noisy_linear_eval_kernel(x_ref, wmu_ref, bmu_ref, o_ref):
    k = pl.program_id(1)

    @pl.when(k == 0)
    def _():
        o_ref[...] = jnp.zeros_like(o_ref)

    o_ref[...] += lax.dot_general(
        x_ref[...], wmu_ref[...],
        dimension_numbers=(((1,), (1,)), ((), ())),
        preferred_element_type=jnp.float32)

    @pl.when(k == pl.num_programs(1) - 1)
    def _():
        o_ref[...] += bmu_ref[...]


# ---------------------------------------------------------------------------
# Tiling plan
# ---------------------------------------------------------------------------
def _round_up(x, m):
    return (x + m - 1) // m * m


@functools.lru_cache(maxsize=1)
def _vmem_budget_bytes():
    """Per-generation VMEM budget (conservative if query unavailable)."""
    try:
        cap = int(pltpu.get_tpu_info().vmem_capacity_bytes)
    except Exception:                      # no TPU info -> assume v7x (64 MiB)
        cap = 64 * 1024 * 1024
    return int(cap * 0.6)                  # headroom for compiler scratch


def _plan(batch, in_pad, out_pad):
    """Pick (b_pad, TN, TK): prefer single K step, then widest N tile."""
    b_pad = _round_up(max(batch, 1), 8)
    budget = _vmem_budget_bytes()

    def working_set(tn, tk):
        w = 3 * 2 * tn * tk * 4            # mu/sigma/eps, double buffered
        xb = 2 * b_pad * tk * 4
        ob = 2 * b_pad * tn * 4
        bb = 3 * 2 * tn * 4
        return w + xb + ob + bb

    # TN: multiple of 128 dividing out_pad; when out_pad >= 256 require >= 2
    # tiles so the parallel N axis can shard across both v7x TensorCores.
    tn_cands = [c for c in (512, 384, 256, 128)
                if c <= out_pad and out_pad % c == 0
                and (out_pad < 256 or out_pad // c >= 2)] or [128]
    # TK: the whole (padded) reduction if it fits, else divisors of in_pad.
    tk_cands = [in_pad] + [c for c in (2048, 1024, 512, 256, 128)
                           if c < in_pad and in_pad % c == 0]

    for tk in tk_cands:                    # single K step first
        for tn in tn_cands:                # then widest N tile
            if working_set(tn, tk) <= budget:
                return b_pad, tn, tk, budget
    return b_pad, 128, 128, budget         # unreachable in practice


# ---------------------------------------------------------------------------
# Wrapper
# ---------------------------------------------------------------------------
def noisy_linear(x, params, training=True, tiles=None):
    """Pallas implementation of NoisyLinear.forward.

    x:       (B, in_features) float32
    params:  dict from init_noisy_linear_params / sample_noise (pre-padded).
    returns: (B, out_features) float32
    """
    B, in_f = x.shape
    in_features = params["in_features"]
    out_f = params["out_features"]
    in_pad = params["in_pad"]
    out_pad = params["out_pad"]
    assert in_f == in_features, "input feature dim mismatch"

    b_pad, tn, tk, budget = _plan(B, in_pad, out_pad)
    if tiles is not None:                  # explicit override (tests/tuning)
        tn, tk = tiles
        assert out_pad % tn == 0 and in_pad % tk == 0

    grid = (out_pad // tn, in_pad // tk)   # (N parallel, K reduction last)

    # Only x needs per-call padding (zero-padded K columns contribute 0).
    if (B, in_f) != (b_pad, in_pad):
        x = jnp.pad(x, ((0, b_pad - B), (0, in_pad - in_f)))

    x_spec = pl.BlockSpec((b_pad, tk), lambda n, k: (0, k))
    w_spec = pl.BlockSpec((tn, tk), lambda n, k: (n, k))
    b_spec = pl.BlockSpec((1, tn), lambda n, k: (0, n))
    o_spec = pl.BlockSpec((b_pad, tn), lambda n, k: (0, n))  # resident over k

    out_shape = jax.ShapeDtypeStruct((b_pad, out_pad), jnp.float32)
    cparams = pltpu.CompilerParams(
        dimension_semantics=("parallel", "arbitrary"),
        vmem_limit_bytes=int(budget))

    n_streams = 3 if training else 1
    cost = pl.CostEstimate(
        flops=2 * b_pad * in_pad * out_pad,
        transcendentals=0,
        bytes_accessed=4 * (n_streams * out_pad * in_pad + n_streams * out_pad
                            + b_pad * in_pad + b_pad * out_pad))

    if training:
        yp = pl.pallas_call(
            _noisy_linear_train_kernel,
            out_shape=out_shape,
            grid_spec=pltpu.PrefetchScalarGridSpec(
                num_scalar_prefetch=0,
                grid=grid,
                in_specs=[x_spec, w_spec, w_spec, w_spec,
                          b_spec, b_spec, b_spec],
                out_specs=o_spec),
            compiler_params=cparams,
            cost_estimate=cost,
        )(x, params["w_mu"], params["w_sigma"], params["w_eps"],
          params["b_mu"], params["b_sigma"], params["b_eps"])
    else:
        yp = pl.pallas_call(
            _noisy_linear_eval_kernel,
            out_shape=out_shape,
            grid_spec=pltpu.PrefetchScalarGridSpec(
                num_scalar_prefetch=0,
                grid=grid,
                in_specs=[x_spec, w_spec, b_spec],
                out_specs=o_spec),
            compiler_params=cparams,
            cost_estimate=cost,
        )(x, params["w_mu"], params["b_mu"])

    return yp[:B, :out_f]


# ---------------------------------------------------------------------------
# Parameter / noise init (reset_parameters() + sample_noise()), PRE-PADDED.
# ---------------------------------------------------------------------------
def _pad2(w, out_pad, in_pad):
    o, i = w.shape
    return jnp.pad(w, ((0, out_pad - o), (0, in_pad - i)))


def _pad1(b, out_pad):
    return jnp.pad(b, (0, out_pad - b.shape[0])).reshape(1, out_pad)


def sample_noise(key, params):
    """Fresh unfactorised standard-normal eps, generated directly at padded
    shape (padded rows/cols never reach the sliced output)."""
    kw, kb = jax.random.split(key)
    out = dict(params)
    out["w_eps"] = jax.random.normal(
        kw, (params["out_pad"], params["in_pad"]), jnp.float32)
    out["b_eps"] = jax.random.normal(kb, (1, params["out_pad"]), jnp.float32)
    return out


def init_noisy_linear_params(key, in_features, out_features, std_init=0.5):
    in_pad = _round_up(in_features, 128)
    out_pad = _round_up(out_features, 128)
    k_wmu, k_bmu, k_noise = jax.random.split(key, 3)
    mu_range = 1.0 / (in_features ** 0.5)
    w_mu = jax.random.uniform(k_wmu, (out_features, in_features),
                              jnp.float32, -mu_range, mu_range)
    b_mu = jax.random.uniform(k_bmu, (out_features,),
                              jnp.float32, -mu_range, mu_range)
    w_sigma = jnp.full((out_features, in_features),
                       std_init / (in_features ** 0.5), jnp.float32)
    b_sigma = jnp.full((out_features,),
                       std_init / (out_features ** 0.5), jnp.float32)
    params = dict(
        in_features=in_features, out_features=out_features,
        in_pad=in_pad, out_pad=out_pad,
        w_mu=_pad2(w_mu, out_pad, in_pad),
        w_sigma=_pad2(w_sigma, out_pad, in_pad),
        b_mu=_pad1(b_mu, out_pad),
        b_sigma=_pad1(b_sigma, out_pad),
    )
    return sample_noise(k_noise, params)


# ---------------------------------------------------------------------------
# Self-test
# ---------------------------------------------------------------------------
def _check(x, params, y_train, y_eval):
    out_f = params["out_features"]
    in_f = params["in_features"]
    w_mu = params["w_mu"][:out_f, :in_f]
    w_sig = params["w_sigma"][:out_f, :in_f]
    w_eps = params["w_eps"][:out_f, :in_f]
    b_mu = params["b_mu"][0, :out_f]
    b_sig = params["b_sigma"][0, :out_f]
    b_eps = params["b_eps"][0, :out_f]
    ref_train = x @ (w_mu + w_sig * w_eps).T + (b_mu + b_sig * b_eps)
    ref_eval = x @ w_mu.T + b_mu
    ok = y_train.shape == (x.shape[0], out_f)
    ok &= y_eval is None or y_eval.shape == (x.shape[0], out_f)
    ok &= bool(jnp.allclose(y_train, ref_train, atol=2e-4, rtol=2e-4))
    if y_eval is not None:
        ok &= bool(jnp.allclose(y_eval, ref_eval, atol=2e-4, rtol=2e-4))
    return ok


if __name__ == "__main__":
    key = jax.random.PRNGKey(0)
    ok = True

    # Tiny single-block config and a multi-N-tile (single-K-step) config.
    configs = [
        (8, 32, 64),     # batch, in_features, out_features
        (8, 640, 384),
    ]
    for batch, in_features, out_features in configs:
        key, k_params, k_x = jax.random.split(key, 3)
        params = init_noisy_linear_params(k_params, in_features, out_features,
                                          std_init=0.5)
        x = jax.random.normal(k_x, (batch, in_features), jnp.float32)

        y_train = jax.block_until_ready(noisy_linear(x, params, training=True))
        y_eval = jax.block_until_ready(noisy_linear(x, params, training=False))
        ok &= _check(x, params, y_train, y_eval)

    # Force the multi-K-step (k-reduction / accumulate-into-output) path.
    key, k_params, k_x = jax.random.split(key, 3)
    params = init_noisy_linear_params(k_params, 640, 384, std_init=0.5)
    x = jax.random.normal(k_x, (8, 640), jnp.float32)
    y_train = jax.block_until_ready(
        noisy_linear(x, params, training=True, tiles=(128, 128)))
    ok &= _check(x, params, y_train, None)

    assert ok
    print("KERNEL_OK")
</pallas_src>

<mosaic_0001>
module attributes {stable_mosaic.version = 11 : i64} {
  func.func @_noisy_linear_train_kernel(%arg0: i32, %arg1: i32, %arg2: memref<8x128xf32, #tpu.memory_space<vmem>>, %arg3: memref<128x128xf32, #tpu.memory_space<vmem>>, %arg4: memref<128x128xf32, #tpu.memory_space<vmem>>, %arg5: memref<128x128xf32, #tpu.memory_space<vmem>>, %arg6: memref<1x128xf32, #tpu.memory_space<vmem>>, %arg7: memref<1x128xf32, #tpu.memory_space<vmem>>, %arg8: memref<1x128xf32, #tpu.memory_space<vmem>>, %arg9: memref<8x128xf32, #tpu.memory_space<vmem>>) attributes {dimension_semantics = [#tpu.dimension_semantics<parallel>, #tpu.dimension_semantics<arbitrary>], iteration_bounds = array<i64: 1, 1>, scalar_prefetch = 0 : i64, scratch_operands = 0 : i64, tpu.core_type = #tpu.core_type<tc>, window_params = [{transform_indices = @transform_0, window_bounds = array<i64: 8, 128>}, {transform_indices = @transform_1, window_bounds = array<i64: 128, 128>}, {transform_indices = @transform_2, window_bounds = array<i64: 128, 128>}, {transform_indices = @transform_3, window_bounds = array<i64: 128, 128>}, {transform_indices = @transform_4, window_bounds = array<i64: 1, 128>}, {transform_indices = @transform_5, window_bounds = array<i64: 1, 128>}, {transform_indices = @transform_6, window_bounds = array<i64: 1, 128>}, {transform_indices = @transform_7, window_bounds = array<i64: 8, 128>}]} {
    %c0_i32 = arith.constant 0 : i32
    %0 = arith.cmpi eq, %arg1, %c0_i32 : i32
    %1 = arith.extui %0 : i1 to i32
    %c0_i32_0 = arith.constant 0 : i32
    %2 = arith.cmpi ne, %1, %c0_i32_0 : i32
    scf.if %2 {
      %cst_14 = arith.constant 0.000000e+00 : f32
      %16 = vector.broadcast %cst_14 : f32 to vector<8x128xf32>
      %c0_15 = arith.constant 0 : index
      %c0_16 = arith.constant 0 : index
      %17 = vector.load %arg9[%c0_15, %c0_16] : memref<8x128xf32, #tpu.memory_space<vmem>>, vector<8x128xf32>
      tpu.vector_store %arg9[%c0_15, %c0_16], %16 {strides = array<i32>} : memref<8x128xf32, #tpu.memory_space<vmem>>, vector<8x128xf32>,
    } else {
    }
    %c0 = arith.constant 0 : index
    %c0_1 = arith.constant 0 : index
    %3 = vector.load %arg3[%c0, %c0_1] : memref<128x128xf32, #tpu.memory_space<vmem>>, vector<128x128xf32>
    %c0_2 = arith.constant 0 : index
    %c0_3 = arith.constant 0 : index
    %4 = vector.load %arg4[%c0_2, %c0_3] : memref<128x128xf32, #tpu.memory_space<vmem>>, vector<128x128xf32>
    %c0_4 = arith.constant 0 : index
    %c0_5 = arith.constant 0 : index
    %5 = vector.load %arg5[%c0_4, %c0_5] : memref<128x128xf32, #tpu.memory_space<vmem>>, vector<128x128xf32>
    %6 = arith.mulf %4, %5 : vector<128x128xf32>
    %7 = arith.addf %3, %6 : vector<128x128xf32>
    %c0_6 = arith.constant 0 : index
    %c0_7 = arith.constant 0 : index
    %8 = vector.load %arg9[%c0_6, %c0_7] : memref<8x128xf32, #tpu.memory_space<vmem>>, vector<8x128xf32>
    %c0_8 = arith.constant 0 : index
    %c0_9 = arith.constant 0 : index
    %9 = vector.load %arg2[%c0_8, %c0_9] : memref<8x128xf32, #tpu.memory_space<vmem>>, vector<8x128xf32>
    %cst = arith.constant dense<0.000000e+00> : vector<8x128xf32>
    %10 = tpu.matmul %9, %7, %cst {dimension_numbers = #tpu.dot_dimension_numbers<[1], [1], [0], [0], [0, 0, 1, 0], [], []>} : vector<8x128xf32>, vector<128x128xf32>, vector<8x128xf32> -> vector<8x128xf32>
    %11 = arith.addf %8, %10 : vector<8x128xf32>
    %c0_10 = arith.constant 0 : index
    %c0_11 = arith.constant 0 : index
    %12 = vector.load %arg9[%c0_10, %c0_11] : memref<8x128xf32, #tpu.memory_space<vmem>>, vector<8x128xf32>
    tpu.vector_store %arg9[%c0_10, %c0_11], %11 {strides = array<i32>} : memref<8x128xf32, #tpu.memory_space<vmem>>, vector<8x128xf32>,
    %c0_i32_12 = arith.constant 0 : i32
    %13 = arith.cmpi eq, %arg1, %c0_i32_12 : i32
    %14 = arith.extui %13 : i1 to i32
    %c0_i32_13 = arith.constant 0 : i32
    %15 = arith.cmpi ne, %14, %c0_i32_13 : i32
    scf.if %15 {
      %c0_14 = arith.constant 0 : index
      %c0_15 = arith.constant 0 : index
      %16 = vector.load %arg9[%c0_14, %c0_15] : memref<8x128xf32, #tpu.memory_space<vmem>>, vector<8x128xf32>
      %c0_16 = arith.constant 0 : index
      %c0_17 = arith.constant 0 : index
      %17 = vector.load %arg6[%c0_16, %c0_17] : memref<1x128xf32, #tpu.memory_space<vmem>>, vector<1x128xf32>
      %c0_18 = arith.constant 0 : index
      %c0_19 = arith.constant 0 : index
      %18 = vector.load %arg7[%c0_18, %c0_19] : memref<1x128xf32, #tpu.memory_space<vmem>>, vector<1x128xf32>
      %c0_20 = arith.constant 0 : index
      %c0_21 = arith.constant 0 : index
      %19 = vector.load %arg8[%c0_20, %c0_21] : memref<1x128xf32, #tpu.memory_space<vmem>>, vector<1x128xf32>
      %20 = arith.mulf %18, %19 : vector<1x128xf32>
      %21 = arith.addf %17, %20 : vector<1x128xf32>
      %22 = vector.broadcast %21 : vector<1x128xf32> to vector<8x128xf32>
      %23 = arith.addf %16, %22 : vector<8x128xf32>
      %c0_22 = arith.constant 0 : index
      %c0_23 = arith.constant 0 : index
      %24 = vector.load %arg9[%c0_22, %c0_23] : memref<8x128xf32, #tpu.memory_space<vmem>>, vector<8x128xf32>
      tpu.vector_store %arg9[%c0_22, %c0_23], %23 {strides = array<i32>} : memref<8x128xf32, #tpu.memory_space<vmem>>, vector<8x128xf32>,
    } else {
    }
    return
  }
  func.func @transform_0(%arg0: i32, %arg1: i32) -> (i32, i32) {
    %c0_i32 = arith.constant 0 : i32
    %c0_i32_0 = arith.constant 0 : i32
    return %c0_i32, %arg1 : i32, i32
  }
  func.func @transform_1(%arg0: i32, %arg1: i32) -> (i32, i32) {
    %c0_i32 = arith.constant 0 : i32
    return %arg0, %arg1 : i32, i32
  }
  func.func @transform_2(%arg0: i32, %arg1: i32) -> (i32, i32) {
    %c0_i32 = arith.constant 0 : i32
    return %arg0, %arg1 : i32, i32
  }
  func.func @transform_3(%arg0: i32, %arg1: i32) -> (i32, i32) {
    %c0_i32 = arith.constant 0 : i32
    return %arg0, %arg1 : i32, i32
  }
  func.func @transform_4(%arg0: i32, %arg1: i32) -> (i32, i32) {
    %c0_i32 = arith.constant 0 : i32
    %c0_i32_0 = arith.constant 0 : i32
    return %c0_i32, %arg0 : i32, i32
  }
  func.func @transform_5(%arg0: i32, %arg1: i32) -> (i32, i32) {
    %c0_i32 = arith.constant 0 : i32
    %c0_i32_0 = arith.constant 0 : i32
    return %c0_i32, %arg0 : i32, i32
  }
  func.func @transform_6(%arg0: i32, %arg1: i32) -> (i32, i32) {
    %c0_i32 = arith.constant 0 : i32
    %c0_i32_0 = arith.constant 0 : i32
    return %c0_i32, %arg0 : i32, i32
  }
  func.func @transform_7(%arg0: i32, %arg1: i32) -> (i32, i32) {
    %c0_i32 = arith.constant 0 : i32
    %c0_i32_0 = arith.constant 0 : i32
    return %c0_i32, %arg0 : i32, i32
  }
}

</mosaic_0001>

<llo_original>
// kernel: tpu_custom_call.1
$region0: #{tpu_custom_call.1}
  #allocation0 [shape = 'u32[]', space=smem, size = 0x4, offset = 0x4, fixed_abs, tag = 'smem constant byte address 0x4 - core index']
  #allocation1 [shape = 'u32[144,128]{1,0:T(1,128)}', space=vmem, size = 0x12000, scoped, tag = 'internal scratch']
  %s0 = inlined_call_operand.hbm [shape: f32[8,128], index: 0, kind: input, shape index: {}]
  %s1 = inlined_call_operand.hbm [shape: f32[128,128], index: 1, kind: input, shape index: {}]
  %s2 = inlined_call_operand.hbm [shape: f32[128,128], index: 2, kind: input, shape index: {}]
  %s3 = inlined_call_operand.hbm [shape: f32[128,128], index: 3, kind: input, shape index: {}]
  %s4 = inlined_call_operand.vmem [shape: f32[1,128], index: 4, kind: input, shape index: {}]
  %s5 = inlined_call_operand.vmem [shape: f32[1,128], index: 5, kind: input, shape index: {}]
  %s6 = inlined_call_operand.vmem [shape: f32[1,128], index: 6, kind: input, shape index: {}]
  %s7 = inlined_call_operand.hbm [shape: f32[8,128], index: 7, kind: output, shape index: {}]
  %s8 = sld [smem:[#allocation0]]
  $region62: #{tpu_custom_call.1} parent=0
    _
  %s10 = ssub.s32 1, %s8
  %s11 = scalar_select 0, %s10, %s8
  $region1: #{tpu_custom_call.1} parent=0
    #allocation2 [shape = 'u8[4096]{0}', space=vmem, size = 0x1000, scoped, tag = 'input window, operand 0, single buffered']
    #allocation3 [shape = 's32[1]{0}', space=sflag, size = 0x4, scoped, tag = 'scoped memory for tpu_custom_call.1']
    #allocation4 [shape = 's32[1]{0}', space=sflag, size = 0x4, scoped, tag = 'scoped memory for tpu_custom_call.1']
    #allocation5 [shape = 'u8[65536]{0}', space=vmem, size = 0x10000, scoped, tag = 'input window, operand 1, single buffered']
    #allocation6 [shape = 's32[1]{0}', space=sflag, size = 0x4, scoped, tag = 'scoped memory for tpu_custom_call.1']
    #allocation7 [shape = 'u8[65536]{0}', space=vmem, size = 0x10000, scoped, tag = 'input window, operand 2, single buffered']
    #allocation8 [shape = 'u8[65536]{0}', space=vmem, size = 0x10000, scoped, tag = 'input window, operand 3, single buffered']
    #allocation9 [shape = 's32[1]{0}', space=sflag, size = 0x4, scoped, tag = 'scoped memory for tpu_custom_call.1']
    #allocation10 [shape = 'u8[4096]{0}', space=vmem, size = 0x1000, scoped, tag = 'output window, operand 0, single buffered']
    %12 = vsyncpa [#allocation3], 0
    %13 = vsyncpa [#allocation6], 0
    %14 = vsyncpa [#allocation9], 0
    %15 = vsyncpa [#allocation4], 0
    // Predicated region
    $region2: #{tpu_custom_call.1} parent=1 // pred_check
      _
    $region3: #{tpu_custom_call.1} parent=1 // pred_check_branch
      %17 = sbr.rel (0) target = $region5
    $region4: #{tpu_custom_call.1} parent=1 // pred_region
      %s19 = ssub.s32 128, 128
      %20 = vsyncadd [#allocation3], %s19
      %s22 = sshll.u32 [#allocation2], 4
      %s23 = int_to_ptr.vmem [resolvable:$true] %s22
      %25 = dma.hbm_to_vmem [thread:$0]  %s0, 128, %s23, [#allocation3]
    $region5: #{tpu_custom_call.1} parent=1 // pred_fallthru
      _
    // Predicated region
    $region6: #{tpu_custom_call.1} parent=1 // pred_check
      _
    $region7: #{tpu_custom_call.1} parent=1 // pred_check_branch
      %27 = sbr.rel (0) target = $region9
    $region8: #{tpu_custom_call.1} parent=1 // pred_region
      %s29 = ssub.s32 2048, 2048
      %30 = vsyncadd [#allocation6], %s29
      %s31 = sshll.u32 [#allocation5], 4
      %s32 = int_to_ptr.vmem [resolvable:$true] %s31
      %37 = dma.hbm_to_vmem [thread:$0]  %s1, 2048, %s32, [#allocation6], 128, 128, 8
    $region9: #{tpu_custom_call.1} parent=1 // pred_fallthru
      _
    // Predicated region
    $region10: #{tpu_custom_call.1} parent=1 // pred_check
      _
    $region11: #{tpu_custom_call.1} parent=1 // pred_check_branch
      %39 = sbr.rel (0) target = $region13
    $region12: #{tpu_custom_call.1} parent=1 // pred_region
      %s41 = ssub.s32 2048, 2048
      %42 = vsyncadd [#allocation6], %s41
      %s43 = sshll.u32 [#allocation7], 4
      %s44 = int_to_ptr.vmem [resolvable:$true] %s43
      %49 = dma.hbm_to_vmem [thread:$0]  %s2, 2048, %s44, [#allocation6], 128, 128, 8
    $region13: #{tpu_custom_call.1} parent=1 // pred_fallthru
      _
    // Predicated region
    $region14: #{tpu_custom_call.1} parent=1 // pred_check
      _
    $region15: #{tpu_custom_call.1} parent=1 // pred_check_branch
      %51 = sbr.rel (0) target = $region17
    $region16: #{tpu_custom_call.1} parent=1 // pred_region
      %s53 = ssub.s32 2048, 2048
      %54 = vsyncadd [#allocation9], %s53
      %s55 = sshll.u32 [#allocation8], 4
      %s56 = int_to_ptr.vmem [resolvable:$true] %s55
      %61 = dma.hbm_to_vmem [thread:$0]  %s3, 2048, %s56, [#allocation9], 128, 128, 8
    $region17: #{tpu_custom_call.1} parent=1 // pred_fallthru
      _
    // Predicated region
    $region18: #{tpu_custom_call.1} parent=1 // pred_check
      _
    $region19: #{tpu_custom_call.1} parent=1 // pred_check_branch
      %63 = sbr.rel (0) target = $region21
    $region20: #{tpu_custom_call.1} parent=1 // pred_region
      _
    $region21: #{tpu_custom_call.1} parent=1 // pred_fallthru
      _
    // Predicated region
    $region22: #{tpu_custom_call.1} parent=1 // pred_check
      _
    $region23: #{tpu_custom_call.1} parent=1 // pred_check_branch
      %65 = sbr.rel (0) target = $region25
    $region24: #{tpu_custom_call.1} parent=1 // pred_region
      _
    $region25: #{tpu_custom_call.1} parent=1 // pred_fallthru
      _
    // Predicated region
    $region26: #{tpu_custom_call.1} parent=1 // pred_check
      _
    $region27: #{tpu_custom_call.1} parent=1 // pred_check_branch
      %67 = sbr.rel (0) target = $region29
    $region28: #{tpu_custom_call.1} parent=1 // pred_region
      _
    $region29: #{tpu_custom_call.1} parent=1 // pred_fallthru
      _
    // Predicated region
    $region30: #{tpu_custom_call.1} parent=1 // pred_check
      _
    $region31: #{tpu_custom_call.1} parent=1 // pred_check_branch
      %69 = sbr.rel (0) target = $region33
    $region32: #{tpu_custom_call.1} parent=1 // pred_region
      %70 = dma.done [#allocation3], 128
    $region33: #{tpu_custom_call.1} parent=1 // pred_fallthru
      _
    // Predicated region
    $region34: #{tpu_custom_call.1} parent=1 // pred_check
      _
    $region35: #{tpu_custom_call.1} parent=1 // pred_check_branch
      %72 = sbr.rel (0) target = $region37
    $region36: #{tpu_custom_call.1} parent=1 // pred_region
      %73 = dma.done [#allocation6], 2048
    $region37: #{tpu_custom_call.1} parent=1 // pred_fallthru
      _
    // Predicated region
    $region38: #{tpu_custom_call.1} parent=1 // pred_check
      _
    $region39: #{tpu_custom_call.1} parent=1 // pred_check_branch
      %75 = sbr.rel (0) target = $region41
    $region40: #{tpu_custom_call.1} parent=1 // pred_region
      %76 = dma.done [#allocation6], 2048
    $region41: #{tpu_custom_call.1} parent=1 // pred_fallthru
      _
    // Predicated region
    $region42: #{tpu_custom_call.1} parent=1 // pred_check
      _
    $region43: #{tpu_custom_call.1} parent=1 // pred_check_branch
      %78 = sbr.rel (0) target = $region45
    $region44: #{tpu_custom_call.1} parent=1 // pred_region
      %79 = dma.done [#allocation9], 2048
    $region45: #{tpu_custom_call.1} parent=1 // pred_fallthru
      _
    %p80 = scmp.eq.s32.totalorder 0, 0
    // Predicated region
    $region46: #{tpu_custom_call.1} parent=1 // pred_check
      %p81 = pneg %p80
    $region47: #{tpu_custom_call.1} parent=1 // pred_check_branch
      %83 = sbr.rel (%p81) target = $region49
    $region48: #{tpu_custom_call.1} parent=1 // pred_region
      %84 = vst [vmem:[#allocation10] sm:$0xff] 0.0
    $region49: #{tpu_custom_call.1} parent=1 // pred_fallthru
      _
    %v85 = vld [vmem:[#allocation5] sm:$0xff]
    %v86 = vld [vmem:[#allocation5 + $0x8] sm:$0xff]
    %v87 = vld [vmem:[#allocation5 + $0x10] sm:$0xff]
    %v88 = vld [vmem:[#allocation5 + $0x18] sm:$0xff]
    %v89 = vld [vmem:[#allocation5 + $0x20] sm:$0xff]
    %v90 = vld [vmem:[#allocation5 + $0x28] sm:$0xff]
    %v91 = vld [vmem:[#allocation5 + $0x30] sm:$0xff]
    %v92 = vld [vmem:[#allocation5 + $0x38] sm:$0xff]
    %v93 = vld [vmem:[#allocation5 + $0x40] sm:$0xff]
    %v94 = vld [vmem:[#allocation5 + $0x48] sm:$0xff]
    %v95 = vld [vmem:[#allocation5 + $0x50] sm:$0xff]
    %v96 = vld [vmem:[#allocation5 + $0x58] sm:$0xff]
    %v97 = vld [vmem:[#allocation5 + $0x60] sm:$0xff]
    %v98 = vld [vmem:[#allocation5 + $0x68] sm:$0xff]
    %v99 = vld [vmem:[#allocation5 + $0x70] sm:$0xff]
    %v100 = vld [vmem:[#allocation5 + $0x78] sm:$0xff]
    %v101 = vld [vmem:[#allocation7] sm:$0xff]
    %v102 = vld [vmem:[#allocation7 + $0x8] sm:$0xff]
    %v103 = vld [vmem:[#allocation7 + $0x10] sm:$0xff]
    %v104 = vld [vmem:[#allocation7 + $0x18] sm:$0xff]
    %v105 = vld [vmem:[#allocation7 + $0x20] sm:$0xff]
    %v106 = vld [vmem:[#allocation7 + $0x28] sm:$0xff]
    %v107 = vld [vmem:[#allocation7 + $0x30] sm:$0xff]
    %v108 = vld [vmem:[#allocation7 + $0x38] sm:$0xff]
    %v109 = vld [vmem:[#allocation7 + $0x40] sm:$0xff]
    %v110 = vld [vmem:[#allocation7 + $0x48] sm:$0xff]
    %v111 = vld [vmem:[#allocation7 + $0x50] sm:$0xff]
    %v112 = vld [vmem:[#allocation7 + $0x58] sm:$0xff]
    %v113 = vld [vmem:[#allocation7 + $0x60] sm:$0xff]
    %v114 = vld [vmem:[#allocation7 + $0x68] sm:$0xff]
    %v115 = vld [vmem:[#allocation7 + $0x70] sm:$0xff]
    %v116 = vld [vmem:[#allocation7 + $0x78] sm:$0xff]
    %v117 = vld [vmem:[#allocation8] sm:$0xff]
    %v118 = vld [vmem:[#allocation8 + $0x8] sm:$0xff]
    %v119 = vld [vmem:[#allocation8 + $0x10] sm:$0xff]
    %v120 = vld [vmem:[#allocation8 + $0x18] sm:$0xff]
    %v121 = vld [vmem:[#allocation8 + $0x20] sm:$0xff]
    %v122 = vld [vmem:[#allocation8 + $0x28] sm:$0xff]
    %v123 = vld [vmem:[#allocation8 + $0x30] sm:$0xff]
    %v124 = vld [vmem:[#allocation8 + $0x38] sm:$0xff]
    %v125 = vld [vmem:[#allocation8 + $0x40] sm:$0xff]
    %v126 = vld [vmem:[#allocation8 + $0x48] sm:$0xff]
    %v127 = vld [vmem:[#allocation8 + $0x50] sm:$0xff]
    %v128 = vld [vmem:[#allocation8 + $0x58] sm:$0xff]
    %v129 = vld [vmem:[#allocation8 + $0x60] sm:$0xff]
    %v130 = vld [vmem:[#allocation8 + $0x68] sm:$0xff]
    %v131 = vld [vmem:[#allocation8 + $0x70] sm:$0xff]
    %v132 = vld [vmem:[#allocation8 + $0x78] sm:$0xff]
    %v133 = vmul.f32 %v101, %v117
    %v134 = vmul.f32 %v102, %v118
    %v135 = vmul.f32 %v103, %v119
    %v136 = vmul.f32 %v104, %v120
    %v137 = vmul.f32 %v105, %v121
    %v138 = vmul.f32 %v106, %v122
    %v139 = vmul.f32 %v107, %v123
    %v140 = vmul.f32 %v108, %v124
    %v141 = vmul.f32 %v109, %v125
    %v142 = vmul.f32 %v110, %v126
    %v143 = vmul.f32 %v111, %v127
    %v144 = vmul.f32 %v112, %v128
    %v145 = vmul.f32 %v113, %v129
    %v146 = vmul.f32 %v114, %v130
    %v147 = vmul.f32 %v115, %v131
    %v148 = vmul.f32 %v116, %v132
    %v149 = vadd.f32 %v85, %v133
    %v150 = vadd.f32 %v86, %v134
    %v151 = vadd.f32 %v87, %v135
    %v152 = vadd.f32 %v88, %v136
    %v153 = vadd.f32 %v89, %v137
    %v154 = vadd.f32 %v90, %v138
    %v155 = vadd.f32 %v91, %v139
    %v156 = vadd.f32 %v92, %v140
    %v157 = vadd.f32 %v93, %v141
    %v158 = vadd.f32 %v94, %v142
    %v159 = vadd.f32 %v95, %v143
    %v160 = vadd.f32 %v96, %v144
    %v161 = vadd.f32 %v97, %v145
    %v162 = vadd.f32 %v98, %v146
    %v163 = vadd.f32 %v99, %v147
    %v164 = vadd.f32 %v100, %v148
    %v165 = vld [vmem:[#allocation10] sm:$0xff]
    %v166 = vld [vmem:[#allocation2] sm:$0xff]
    %167 = vmatprep.subr.mxu0 0.0
    %168 = vmatpush1.xpose.msra.mxu0 %v164
    %169 = vmatprep.subr.mxu0 0.0
    %170 = vmatpush1.xpose.msra.mxu0 %v163
    %171 = vmatprep.subr.mxu0 0.0
    %172 = vmatpush1.xpose.msra.mxu0 %v162
    %173 = vmatprep.subr.mxu0 0.0
    %174 = vmatpush1.xpose.msra.mxu0 %v161
    %175 = vmatprep.subr.mxu0 0.0
    %176 = vmatpush1.xpose.msra.mxu0 %v160
    %177 = vmatprep.subr.mxu0 0.0
    %178 = vmatpush1.xpose.msra.mxu0 %v159
    %179 = vmatprep.subr.mxu0 0.0
    %180 = vmatpush1.xpose.msra.mxu0 %v158
    %181 = vmatprep.subr.mxu0 0.0
    %182 = vmatpush1.xpose.msra.mxu0 %v157
    %183 = vmatprep.subr.mxu0 0.0
    %184 = vmatpush1.xpose.msra.mxu0 %v156
    %185 = vmatprep.subr.mxu0 0.0
    %186 = vmatpush1.xpose.msra.mxu0 %v155
    %187 = vmatprep.subr.mxu0 0.0
    %188 = vmatpush1.xpose.msra.mxu0 %v154
    %189 = vmatprep.subr.mxu0 0.0
    %190 = vmatpush1.xpose.msra.mxu0 %v153
    %191 = vmatprep.subr.mxu0 0.0
    %192 = vmatpush1.xpose.msra.mxu0 %v152
    %193 = vmatprep.subr.mxu0 0.0
    %194 = vmatpush1.xpose.msra.mxu0 %v151
    %195 = vmatprep.subr.mxu0 0.0
    %196 = vmatpush1.xpose.msra.mxu0 %v150
    %197 = vmatprep.subr.mxu0 0.0
    %198 = vmatpush1.xpose.msra.mxu0 %v149
    %199 = vmatprep.subr.mxu0 0.0
    %200 = vmatpush2.xpose.msra.mxu0 0.0
    %201 = vmatprep.subr.mxu0 0.0
    %202 = vmatpush2.xpose.msra.mxu0 0.0
    %203 = vmatprep.subr.mxu0 0.0
    %204 = vmatpush2.xpose.msra.mxu0 0.0
    %205 = vmatprep.subr.mxu0 0.0
    %206 = vmatpush2.xpose.msra.mxu0 0.0
    %207 = vmatprep.subr.mxu0 0.0
    %208 = vmatpush2.xpose.msra.mxu0 0.0
    %209 = vmatprep.subr.mxu0 0.0
    %210 = vmatpush2.xpose.msra.mxu0 0.0
    %211 = vmatprep.subr.mxu0 0.0
    %212 = vmatpush2.xpose.msra.mxu0 0.0
    %213 = vmatprep.subr.mxu0 0.0
    %214 = vmatpush2.xpose.msra.mxu0 0.0
    %215 = vmatprep.subr.mxu0 0.0
    %216 = vmatpush2.xpose.msra.mxu0 0.0
    %217 = vmatprep.subr.mxu0 0.0
    %218 = vmatpush2.xpose.msra.mxu0 0.0
    %219 = vmatprep.subr.mxu0 0.0
    %220 = vmatpush2.xpose.msra.mxu0 0.0
    %221 = vmatprep.subr.mxu0 0.0
    %222 = vmatpush2.xpose.msra.mxu0 0.0
    %223 = vmatprep.subr.mxu0 0.0
    %224 = vmatpush2.xpose.msra.mxu0 0.0
    %225 = vmatprep.subr.mxu0 0.0
    %226 = vmatpush2.xpose.msra.mxu0 0.0
    %227 = vmatprep.subr.mxu0 0.0
    %228 = vmatpush2.xpose.msra.mxu0 0.0
    %229 = vmatprep.subr.mxu0 0.0
    %230 = vmatpush2.xpose.msra.mxu0 0.0
    %231 = vmatprep.mubr.f32.mxu0 0.0
    %232 = vmatmul.mubr.f32.gmra.mxu0 %v166
    %v233 = vpop.f32.mrf.mxu0
    %v234 = vadd.f32 0.0, %v233
    %v235 = vpop.f32.mrf.mxu0
    %236 = vdwg.mxu0
    %v237 = vadd.f32 %v165, %v234
    %238 = vst [vmem:[#allocation10] sm:$0xff] %v237
    // Predicated region
    $region50: #{tpu_custom_call.1} parent=1 // pred_check
      %p239 = pneg %p80
    $region51: #{tpu_custom_call.1} parent=1 // pred_check_branch
      %241 = sbr.rel (%p239) target = $region53
    $region52: #{tpu_custom_call.1} parent=1 // pred_region
      %v242 = vld [vmem:[#allocation10] sm:$0xff]
      %v243 = vld [vmem:[%s4] sm:$0x1]
      %v244 = vld [vmem:[%s5] sm:$0x1]
      %v245 = vld [vmem:[%s6] sm:$0x1]
      %v246 = vmul.f32 %v244, %v245
      %v247 = vadd.f32 %v243, %v246
      %v249 = vlaneseq
      %v250 = vshrl.u32 %v249, 7
      %v251 = vsub.s32 0, %v250
      %v252 = vrot.slane %v247, %v251
      %v254 = vadd.f32 %v242, %v252
      %255 = vst [vmem:[#allocation10] sm:$0xff] %v254
    $region53: #{tpu_custom_call.1} parent=1 // pred_fallthru
      _
    // Predicated region
    $region54: #{tpu_custom_call.1} parent=1 // pred_check
      _
    $region55: #{tpu_custom_call.1} parent=1 // pred_check_branch
      %257 = sbr.rel (0) target = $region57
    $region56: #{tpu_custom_call.1} parent=1 // pred_region
      %s259 = ssub.s32 128, 128
      %260 = vsyncadd [#allocation4], %s259
      %s262 = sshll.u32 [#allocation10], 4
      %s263 = int_to_ptr.vmem [resolvable:$true] %s262
      %265 = dma.vmem_to_hbm [thread:$0]  %s263, 128, %s7, [#allocation4]
    $region57: #{tpu_custom_call.1} parent=1 // pred_fallthru
      _
    // Predicated region
    $region58: #{tpu_custom_call.1} parent=1 // pred_check
      _
    $region59: #{tpu_custom_call.1} parent=1 // pred_check_branch
      %267 = sbr.rel (0) target = $region61
    $region60: #{tpu_custom_call.1} parent=1 // pred_region
      %268 = dma.done [#allocation4], 128
    $region61: #{tpu_custom_call.1} parent=1 // pred_fallthru
      _
    %269 = vsyncpa [#allocation3], 1
    %270 = vsyncpa [#allocation6], 1
    %271 = vsyncpa [#allocation9], 1
    %272 = vsyncpa [#allocation4], 1

</llo_original>
